<compile_context>
chip_gen: v5e
topology: v5e:2x2
jax: 0.10.0
libtpu: 0.0.40
codegen_flags: <defaults>
</compile_context>

<pallas_src>
import functools

import jax
import jax.numpy as jnp
import numpy as np
from jax.experimental import pallas as pl
from jax.experimental.pallas import tpu as pltpu


def _ls_kernel(tgt_ref, logits_ref, loss_ref, *, eps, n_class, pad_id, ignore_index):
    logits = logits_ref[...].astype(jnp.float32)            # (tb, C)
    tgt = tgt_ref[...]                                       # (tb, 1) int32

    mask = (tgt != ignore_index).astype(jnp.float32)         # (tb, 1)
    tgt_filled = jnp.where(tgt == ignore_index, jnp.int32(pad_id), tgt)

    # Numerically stable log-softmax pieces, without materializing log_prb.
    m = jnp.max(logits, axis=1, keepdims=True)               # (tb, 1)
    z = logits - m                                           # (tb, C)
    lse = jnp.log(jnp.sum(jnp.exp(z), axis=1, keepdims=True))  # (tb, 1)

    sum_z = jnp.sum(z, axis=1, keepdims=True)                # (tb, 1)
    col = jax.lax.broadcasted_iota(jnp.int32, z.shape, 1)    # (tb, C)
    z_t = jnp.sum(jnp.where(col == tgt_filled, z, 0.0),
                  axis=1, keepdims=True)                     # (tb, 1) = z[target]

    c_uni = eps / (n_class - 1)
    c_tgt = (1.0 - eps) - c_uni
    # sum_c smoothed[c] * log_prb[c]  ==  c_uni*(sum_z - C*lse) + c_tgt*(z_t - lse)
    sum_smoothed_logprb = c_uni * (sum_z - n_class * lse) + c_tgt * (z_t - lse)

    loss_ref[...] = -sum_smoothed_logprb * mask              # (tb, 1)


def _round_up(x, m):
    return (x + m - 1) // m * m


def label_smoothing_loss(output, target, *, label_smoothing, tgt_size,
                         pad_id=1, ignore_index=-100, tb=None,
                         vmem_limit_bytes=64 << 20):
    """output: (B, C) float32/bfloat16 logits; target: (B,) int. Returns scalar mean loss."""
    B, C = output.shape
    assert C == tgt_size

    itemsize = jnp.dtype(output.dtype).itemsize
    if tb is None:
        # Size the batch tile so the double-buffered logits block plus a few f32
        # temporaries stays well inside the VMEM limit (conservative enough for
        # v7x's 64 MiB physical VMEM; generous for v5e/v6e's 128 MiB).
        budget = min(int(vmem_limit_bytes), 48 << 20) // 2
        per_row = C * (2 * itemsize + 3 * 4)   # 2x pipelined input buf + ~3 f32 temps
        tb = budget // max(per_row, 1)
    tb = int(max(16, min(min(tb, 512), _round_up(B, 16))))
    tb = (tb // 16) * 16                        # bf16 sublane packing + f32 (8,*) rule

    Bp = _round_up(B, tb)
    if Bp != B:
        output = jnp.pad(output, ((0, Bp - B), (0, 0)))
        target = jnp.pad(target, (0, Bp - B), constant_values=ignore_index)
    target2d = target.astype(jnp.int32).reshape(Bp, 1)

    kernel = functools.partial(
        _ls_kernel,
        eps=float(label_smoothing),
        n_class=int(tgt_size),
        pad_id=int(pad_id),
        ignore_index=int(ignore_index),
    )

    row_loss = pl.pallas_call(
        kernel,
        out_shape=jax.ShapeDtypeStruct((Bp, 1), jnp.float32),
        grid_spec=pltpu.PrefetchScalarGridSpec(
            num_scalar_prefetch=0,
            grid=(Bp // tb,),
            in_specs=[
                pl.BlockSpec((tb, 1), lambda i: (i, 0)),    # target
                pl.BlockSpec((tb, C), lambda i: (i, 0)),    # logits
            ],
            out_specs=pl.BlockSpec((tb, 1), lambda i: (i, 0)),
        ),
        compiler_params=pltpu.CompilerParams(
            dimension_semantics=("parallel",),
            vmem_limit_bytes=int(vmem_limit_bytes)),
    )(target2d, output)

    # torch .mean() divides by the full (unpadded) batch; padded rows contribute 0.
    return jnp.sum(row_loss) / jnp.float32(B)


def _reference(output, target, *, label_smoothing, tgt_size, pad_id, ignore_index):
    eps = label_smoothing
    mask = (target != ignore_index).astype(jnp.float32)
    tgt = jnp.where(target == ignore_index, pad_id, target)
    one_hot = jax.nn.one_hot(tgt, tgt_size, dtype=jnp.float32)
    one_hot = one_hot * (1 - eps) + (1 - one_hot) * eps / (tgt_size - 1)
    log_prb = jax.nn.log_softmax(output.astype(jnp.float32), axis=1)
    loss = -(one_hot * log_prb).sum(axis=1) * mask
    return loss.mean()


def _make_inputs(key, B, C, ignore_index, dtype=jnp.float32):
    k1, k2, k3 = jax.random.split(key, 3)
    output = jax.random.normal(k1, (B, C), dtype=jnp.float32).astype(dtype)
    target = jax.random.randint(k2, (B,), 0, C, dtype=jnp.int32)
    ignore_mask = jax.random.bernoulli(k3, 0.25, (B,))
    target = jnp.where(ignore_mask, jnp.int32(ignore_index), target)
    return output, target


if __name__ == "__main__":
    label_smoothing = 0.1
    pad_id = 1
    ignore_index = -100
    key = jax.random.PRNGKey(0)

    # --- test 1: small case, auto tile (single grid step) ---------------------
    B, C = 16, 32
    out1, tgt1 = _make_inputs(key, B, C, ignore_index)
    loss1 = jax.block_until_ready(label_smoothing_loss(
        out1, tgt1, label_smoothing=label_smoothing, tgt_size=C,
        pad_id=pad_id, ignore_index=ignore_index))
    ref1 = _reference(out1, tgt1, label_smoothing=label_smoothing, tgt_size=C,
                      pad_id=pad_id, ignore_index=ignore_index)
    np.testing.assert_allclose(np.asarray(loss1), np.asarray(ref1),
                               rtol=1e-5, atol=1e-5)

    # --- test 2: multi-tile parallel grid, lane-dense C ------------------------
    B, C = 72, 128   # pads to 80 rows of tb=16 -> 5 parallel grid steps
    key2 = jax.random.PRNGKey(1)
    out2, tgt2 = _make_inputs(key2, B, C, ignore_index)
    loss2 = jax.block_until_ready(label_smoothing_loss(
        out2, tgt2, label_smoothing=label_smoothing, tgt_size=C,
        pad_id=pad_id, ignore_index=ignore_index, tb=16))
    ref2 = _reference(out2, tgt2, label_smoothing=label_smoothing, tgt_size=C,
                      pad_id=pad_id, ignore_index=ignore_index)
    np.testing.assert_allclose(np.asarray(loss2), np.asarray(ref2),
                               rtol=1e-5, atol=1e-5)

    # --- test 3: bf16 logits (half the HBM traffic), f32 math in-kernel --------
    B, C = 32, 256
    key3 = jax.random.PRNGKey(2)
    out3, tgt3 = _make_inputs(key3, B, C, ignore_index, dtype=jnp.bfloat16)
    loss3 = jax.block_until_ready(label_smoothing_loss(
        out3, tgt3, label_smoothing=label_smoothing, tgt_size=C,
        pad_id=pad_id, ignore_index=ignore_index))
    ref3 = _reference(out3, tgt3, label_smoothing=label_smoothing, tgt_size=C,
                      pad_id=pad_id, ignore_index=ignore_index)
    np.testing.assert_allclose(np.asarray(loss3), np.asarray(ref3),
                               rtol=1e-4, atol=1e-4)

    print("KERNEL_OK")
</pallas_src>

<mosaic_0001>
module attributes {stable_mosaic.version = 11 : i64} {
  func.func @_ls_kernel(%arg0: i32, %arg1: memref<16x1xi32, #tpu.memory_space<vmem>>, %arg2: memref<16x32xf32, #tpu.memory_space<vmem>>, %arg3: memref<16x1xf32, #tpu.memory_space<vmem>>) attributes {dimension_semantics = [#tpu.dimension_semantics<parallel>], iteration_bounds = array<i64: 1>, scalar_prefetch = 0 : i64, scratch_operands = 0 : i64, tpu.core_type = #tpu.core_type<tc>, window_params = [{transform_indices = @transform_0, window_bounds = array<i64: 16, 1>}, {transform_indices = @transform_1, window_bounds = array<i64: 16, 32>}, {transform_indices = @transform_2, window_bounds = array<i64: 16, 1>}]} {
    %c0 = arith.constant 0 : index
    %c0_0 = arith.constant 0 : index
    %0 = vector.load %arg2[%c0, %c0_0] : memref<16x32xf32, #tpu.memory_space<vmem>>, vector<16x32xf32>
    %c0_1 = arith.constant 0 : index
    %c0_2 = arith.constant 0 : index
    %1 = vector.load %arg1[%c0_1, %c0_2] : memref<16x1xi32, #tpu.memory_space<vmem>>, vector<16x1xi32>
    %c-100_i32 = arith.constant -100 : i32
    %2 = vector.broadcast %c-100_i32 : i32 to vector<16x1xi32>
    %3 = arith.cmpi ne, %1, %2 : vector<16x1xi32>
    %4 = arith.extui %3 : vector<16x1xi1> to vector<16x1xi32>
    %5 = arith.sitofp %4 : vector<16x1xi32> to vector<16x1xf32>
    %c-100_i32_3 = arith.constant -100 : i32
    %6 = vector.broadcast %c-100_i32_3 : i32 to vector<16x1xi32>
    %7 = arith.cmpi eq, %1, %6 : vector<16x1xi32>
    %c1_i32 = arith.constant 1 : i32
    %8 = vector.broadcast %c1_i32 : i32 to vector<16x1xi32>
    %9 = arith.select %7, %8, %1 : vector<16x1xi1>, vector<16x1xi32>
    %cst = arith.constant dense<0xFF800000> : vector<16xf32>
    %10 = vector.multi_reduction <maximumf>, %0, %cst [1] : vector<16x32xf32> to vector<16xf32>
    %11 = vector.shape_cast %10 : vector<16xf32> to vector<16x1xf32>
    %12 = vector.broadcast %11 : vector<16x1xf32> to vector<16x32xf32>
    %13 = arith.subf %0, %12 : vector<16x32xf32>
    %14 = math.exp %13 : vector<16x32xf32>
    %cst_4 = arith.constant dense<0.000000e+00> : vector<16xf32>
    %15 = vector.multi_reduction <add>, %14, %cst_4 [1] : vector<16x32xf32> to vector<16xf32>
    %16 = vector.shape_cast %15 : vector<16xf32> to vector<16x1xf32>
    %17 = math.log %16 : vector<16x1xf32>
    %cst_5 = arith.constant dense<0.000000e+00> : vector<16xf32>
    %18 = vector.multi_reduction <add>, %13, %cst_5 [1] : vector<16x32xf32> to vector<16xf32>
    %19 = vector.shape_cast %18 : vector<16xf32> to vector<16x1xf32>
    %20 = tpu.iota {dimensions = array<i32: 1>} : vector<16x32xi32>
    %21 = vector.broadcast %9 : vector<16x1xi32> to vector<16x32xi32>
    %22 = arith.cmpi eq, %20, %21 : vector<16x32xi32>
    %cst_6 = arith.constant 0.000000e+00 : f32
    %23 = vector.broadcast %cst_6 : f32 to vector<16x32xf32>
    %24 = arith.select %22, %13, %23 : vector<16x32xi1>, vector<16x32xf32>
    %cst_7 = arith.constant dense<0.000000e+00> : vector<16xf32>
    %25 = vector.multi_reduction <add>, %24, %cst_7 [1] : vector<16x32xf32> to vector<16xf32>
    %26 = vector.shape_cast %25 : vector<16xf32> to vector<16x1xf32>
    %cst_8 = arith.constant 3.200000e+01 : f32
    %27 = vector.broadcast %cst_8 : f32 to vector<16x1xf32>
    %28 = arith.mulf %27, %17 : vector<16x1xf32>
    %29 = arith.subf %19, %28 : vector<16x1xf32>
    %cst_9 = arith.constant 0.0032258064 : f32
    %30 = vector.broadcast %cst_9 : f32 to vector<16x1xf32>
    %31 = arith.mulf %30, %29 : vector<16x1xf32>
    %32 = arith.subf %26, %17 : vector<16x1xf32>
    %cst_10 = arith.constant 0.896774172 : f32
    %33 = vector.broadcast %cst_10 : f32 to vector<16x1xf32>
    %34 = arith.mulf %33, %32 : vector<16x1xf32>
    %35 = arith.addf %31, %34 : vector<16x1xf32>
    %cst_11 = arith.constant 0.000000e+00 : f32
    %36 = vector.broadcast %cst_11 : f32 to vector<16x1xf32>
    %37 = arith.subf %36, %35 : vector<16x1xf32>
    %38 = arith.mulf %37, %5 : vector<16x1xf32>
    %c0_12 = arith.constant 0 : index
    %c0_13 = arith.constant 0 : index
    %39 = vector.load %arg3[%c0_12, %c0_13] : memref<16x1xf32, #tpu.memory_space<vmem>>, vector<16x1xf32>
    tpu.vector_store %arg3[%c0_12, %c0_13], %38 {strides = array<i32>} : memref<16x1xf32, #tpu.memory_space<vmem>>, vector<16x1xf32>,
    return
  }
  func.func @transform_0(%arg0: i32) -> (i32, i32) {
    %c0_i32 = arith.constant 0 : i32
    %c0_i32_0 = arith.constant 0 : i32
    return %arg0, %c0_i32 : i32, i32
  }
  func.func @transform_1(%arg0: i32) -> (i32, i32) {
    %c0_i32 = arith.constant 0 : i32
    %c0_i32_0 = arith.constant 0 : i32
    return %arg0, %c0_i32 : i32, i32
  }
  func.func @transform_2(%arg0: i32) -> (i32, i32) {
    %c0_i32 = arith.constant 0 : i32
    %c0_i32_0 = arith.constant 0 : i32
    return %arg0, %c0_i32 : i32, i32
  }
}

</mosaic_0001>

<llo_original>
// kernel: tpu_custom_call.1
$region0: #{tpu_custom_call.1}
  #allocation0 [shape = 'u32[]', space=smem, size = 0x4, offset = 0x4, fixed_abs, tag = 'smem constant byte address 0x4 - core index']
  #allocation1 [shape = 'u32[72,128]{1,0:T(1,128)}', space=vmem, size = 0x9000, scoped, tag = 'internal scratch']
  %s0 = inlined_call_operand.vmem [shape: s32[16,1], index: 0, kind: input, shape index: {}]
  %s1 = inlined_call_operand.vmem [shape: f32[16,32], index: 1, kind: input, shape index: {}]
  %s2 = inlined_call_operand.vmem [shape: f32[16,1], index: 2, kind: output, shape index: {}]
  %s3 = sld [smem:[#allocation0]]
  $region18: #{tpu_custom_call.1} parent=0
    _
  %s5 = ssub.s32 1, %s3
  %s6 = scalar_select 0, %s5, %s3
  // Predicated region
  $region2: #{tpu_custom_call.1} parent=0 // pred_check
    _
  $region3: #{tpu_custom_call.1} parent=0 // pred_check_branch
    %8 = sbr.rel (0) target = $region5
  $region4: #{tpu_custom_call.1} parent=0 // pred_region
    _
  $region5: #{tpu_custom_call.1} parent=0 // pred_fallthru
    _
  // Predicated region
  $region6: #{tpu_custom_call.1} parent=0 // pred_check
    _
  $region7: #{tpu_custom_call.1} parent=0 // pred_check_branch
    %10 = sbr.rel (0) target = $region9
  $region8: #{tpu_custom_call.1} parent=0 // pred_region
    _
  $region9: #{tpu_custom_call.1} parent=0 // pred_fallthru
    _
  %v11 = vld [vmem:[%s1] sm:$0xff]
  %v12 = vld [vmem:[%s1 + $0x8] sm:$0xff]
  %v13 = vld [vmem:[%s0] sm:$0xff]
  %v14 = vld [vmem:[%s0 + $0x8] sm:$0xff]
  %vm15 = vcmp.ne.s32.totalorder %v13, 4294967196
  %vm16 = vcmp.ne.s32.totalorder %v14, 4294967196
  %v17 = vsel %vm15, 1, 0
  %v18 = vsel %vm16, 1, 0
  %v19 = vcvt.s32.f32 %v17
  %v20 = vcvt.s32.f32 %v18
  %vm21 = vcmp.eq.s32.totalorder %v13, 4294967196
  %vm22 = vcmp.eq.s32.totalorder %v14, 4294967196
  %v23 = vsel %vm21, 1, %v13
  %v24 = vsel %vm22, 1, %v14
  %vm25 = vcmask 261120
  %v26 = vsel %vm25, %v11, -inf
  %27 = vmax.xlane.f32.xlu0 %v26
  %v28 = vpop.xlane.xlu0 %27
  %v29 = vsel %vm25, %v12, -inf
  %30 = vmax.xlane.f32.xlu0 %v29
  %v31 = vpop.xlane.xlu0 %30
  %v32 = vsub.f32 %v11, %v28
  %v33 = vsub.f32 %v12, %v31
  %v34 = vmul.f32 %v32, 1.442695
  %v35 = vpow.pop %v34
  %v36 = vmul.f32 %v33, 1.442695
  %v37 = vpow.pop %v36
  %v38 = vsel %vm25, %v35, 0.0
  %39 = vadd.xlane.f32.xlu0 %v38
  %v40 = vpop.xlane.xlu0 %39
  %v41 = vsel %vm25, %v37, 0.0
  %42 = vadd.xlane.f32.xlu0 %v41
  %v43 = vpop.xlane.xlu0 %42
  %v44 = vlog2.pop %v40
  %v45 = vmul.f32 %v44, 0.6931472
  %v46 = vlog2.pop %v43
  %v47 = vmul.f32 %v46, 0.6931472
  %v48 = vsel %vm25, %v32, 0.0
  %49 = vadd.xlane.f32.xlu0 %v48
  %v50 = vpop.xlane.xlu0 %49
  %v51 = vsel %vm25, %v33, 0.0
  %52 = vadd.xlane.f32.xlu0 %v51
  %v53 = vpop.xlane.xlu0 %52
  %v54 = vlaneseq
  %v55 = vand.u32 %v54, 127
  %56 = vset.pattern.permute.xlu0 0
  %57 = vperm.xlu0 %56, %v23
  %v58 = vpop.permute.xlu0 %57
  %59 = vset.pattern.permute.xlu0 0
  %60 = vperm.xlu0 %59, %v24
  %v61 = vpop.permute.xlu0 %60
  %vm62 = vcmp.eq.s32.totalorder %v55, %v58
  %vm63 = vcmp.eq.s32.totalorder %v55, %v61
  %v64 = vsel %vm62, %v32, 0.0
  %v65 = vsel %vm63, %v33, 0.0
  %v66 = vsel %vm25, %v64, 0.0
  %67 = vadd.xlane.f32.xlu0 %v66
  %v68 = vpop.xlane.xlu0 %67
  %v69 = vsel %vm25, %v65, 0.0
  %70 = vadd.xlane.f32.xlu0 %v69
  %v71 = vpop.xlane.xlu0 %70
  %v72 = vmul.f32 %v45, 32.0
  %v73 = vmul.f32 %v47, 32.0
  %v74 = vsub.f32 %v50, %v72
  %v75 = vsub.f32 %v53, %v73
  %v76 = vmul.f32 %v74, 0.0032258064
  %v77 = vmul.f32 %v75, 0.0032258064
  %v78 = vsub.f32 %v68, %v45
  %v79 = vsub.f32 %v71, %v47
  %v80 = vmul.f32 %v78, 0.8967742
  %v81 = vmul.f32 %v79, 0.8967742
  %v82 = vadd.f32 %v76, %v80
  %v83 = vadd.f32 %v77, %v81
  %v84 = vsub.f32 0.0, %v82
  %v85 = vsub.f32 0.0, %v83
  %v86 = vmul.f32 %v84, %v19
  %v87 = vmul.f32 %v85, %v20
  %vm88 = vcmask 7168
  %89 = vst.msk [vmem:[%s2] sm:$0xff] %vm88, %v86
  %90 = vst.msk [vmem:[%s2 + $0x8] sm:$0xff] %vm88, %v87
  // Predicated region
  $region10: #{tpu_custom_call.1} parent=0 // pred_check
    _
  $region11: #{tpu_custom_call.1} parent=0 // pred_check_branch
    %92 = sbr.rel (0) target = $region13
  $region12: #{tpu_custom_call.1} parent=0 // pred_region
    _
  $region13: #{tpu_custom_call.1} parent=0 // pred_fallthru
    _
  // Predicated region
  $region14: #{tpu_custom_call.1} parent=0 // pred_check
    _
  $region15: #{tpu_custom_call.1} parent=0 // pred_check_branch
    %94 = sbr.rel (0) target = $region17
  $region16: #{tpu_custom_call.1} parent=0 // pred_region
    _
  $region17: #{tpu_custom_call.1} parent=0 // pred_fallthru
    _

</llo_original>
